<compile_context>
chip_gen: v5e
topology: v5e:2x2
jax: 0.10.0
libtpu: 0.0.40
codegen_flags: <defaults>
</compile_context>

<pallas_src>
import functools
import inspect
import math

import jax
import jax.numpy as jnp
from jax import lax
from jax.experimental import pallas as pl
from jax.experimental.pallas import tpu as pltpu


def _round_up(x: int, m: int) -> int:
    return ((x + m - 1) // m) * m


# Packed per-feature parameter slabs (rows zero-padded to De; bn_var pads with 1).
_B1, _LN_G, _LN_B = 0, 1, 2                       # pvh: (3, De)
_B2, _BN_G, _BN_B, _BN_M, _BN_V = 0, 1, 2, 3, 4   # pvy: (5, De)


# ---------------------------------------------------------------------------
# kernel bodies
# ---------------------------------------------------------------------------
def _fc1_hidden(x, w1, pvh, *, apply_layer_norm, d_true, d_pad, ln_eps):
    """fc1 -> [LayerNorm] -> exact-erf GELU. MXU in operand dtype, math in f32."""
    h = jnp.dot(x, w1, preferred_element_type=jnp.float32)
    pvh = pvh.astype(jnp.float32)
    h = h + pvh[_B1:_B1 + 1, :]
    if apply_layer_norm:
        inv_d = 1.0 / float(d_true)
        # padded lanes of h are exactly 0 -> the sum over all lanes is the true sum
        mu = jnp.sum(h, axis=-1, keepdims=True) * inv_d
        hc = h - mu
        if d_true != d_pad:
            # keep padded lanes out of the variance (two-pass, no E[x^2]-mu^2 cancellation)
            lane = lax.broadcasted_iota(jnp.int32, hc.shape, hc.ndim - 1)
            hc = jnp.where(lane < d_true, hc, 0.0)
        var = jnp.sum(hc * hc, axis=-1, keepdims=True) * inv_d
        h = hc * lax.rsqrt(var + ln_eps)
        h = h * pvh[_LN_G:_LN_G + 1, :] + pvh[_LN_B:_LN_B + 1, :]
    # exact (erf) GELU, matching F.gelu default
    h = 0.5 * h * (1.0 + lax.erf(h * (1.0 / math.sqrt(2.0))))
    # Dropout(p=0.2) is identity in eval mode.
    # TODO(synk): training-mode dropout (pltpu.prng_random_bits mask) not emitted here.
    return h


def _fc2_out(h, w2, pvy, *, apply_batch_norm, bn_eps):
    y = jnp.dot(h, w2, preferred_element_type=jnp.float32)
    pvy = pvy.astype(jnp.float32)
    y = y + pvy[_B2:_B2 + 1, :]
    if apply_batch_norm:
        # BatchNorm1d eval mode: per-feature affine with running stats.
        y = (y - pvy[_BN_M:_BN_M + 1, :]) * lax.rsqrt(pvy[_BN_V:_BN_V + 1, :] + bn_eps)
        y = y * pvy[_BN_G:_BN_G + 1, :] + pvy[_BN_B:_BN_B + 1, :]
    return y


def _fused_kernel(x_ref, w1_ref, pvh_ref, w2_ref, pvy_ref, o_ref, *,
                  apply_layer_norm, apply_batch_norm, d_true, d_pad, ln_eps, bn_eps):
    h = _fc1_hidden(x_ref[...], w1_ref[...], pvh_ref[...],
                    apply_layer_norm=apply_layer_norm, d_true=d_true, d_pad=d_pad,
                    ln_eps=ln_eps)
    y = _fc2_out(h.astype(w2_ref.dtype), w2_ref[...], pvy_ref[...],
                 apply_batch_norm=apply_batch_norm, bn_eps=bn_eps)
    o_ref[...] = y.astype(o_ref.dtype)


def _ntiled_kernel(x_ref, w1_ref, pvh_ref, w2_ref, pvy_ref, o_ref, h_ref, *,
                   apply_layer_norm, apply_batch_norm, d_true, d_pad, ln_eps, bn_eps):
    # Inner ("arbitrary") grid axis tiles fc2 over output features.  The hidden activation
    # for this row tile is computed once (j == 0) and kept resident in VMEM scratch.
    @pl.when(pl.program_id(1) == 0)
    def _():
        h = _fc1_hidden(x_ref[...], w1_ref[...], pvh_ref[...],
                        apply_layer_norm=apply_layer_norm, d_true=d_true, d_pad=d_pad,
                        ln_eps=ln_eps)
        h_ref[...] = h.astype(h_ref.dtype)
    y = _fc2_out(h_ref[...], w2_ref[...], pvy_ref[...],
                 apply_batch_norm=apply_batch_norm, bn_eps=bn_eps)
    o_ref[...] = y.astype(o_ref.dtype)


# ---------------------------------------------------------------------------
# pallas_call builders
# ---------------------------------------------------------------------------
def _supports_pipeline_mode() -> bool:
    if not hasattr(pl, "Buffered"):
        return False
    try:
        return "pipeline_mode" in inspect.signature(pl.BlockSpec).parameters
    except (TypeError, ValueError):
        return False


def _resident_spec(shape, index_map, single_buffer):
    # Constant-index (resident) block: single buffering when supported saves VMEM.
    if single_buffer:
        return pl.BlockSpec(shape, index_map, pipeline_mode=pl.Buffered(1))
    return pl.BlockSpec(shape, index_map)


def _build_fused_call(kernel, out_shape, *, bm, Dr, De, grid_m, vmem_limit, single_buffer):
    const = lambda i: (0, 0)
    return pl.pallas_call(
        kernel,
        out_shape=out_shape,
        grid_spec=pltpu.PrefetchScalarGridSpec(
            num_scalar_prefetch=0,
            grid=(grid_m,),
            in_specs=[
                pl.BlockSpec((bm, Dr), lambda i: (i, 0)),         # x row tile
                _resident_spec((Dr, De), const, single_buffer),   # W1^T (resident)
                _resident_spec((3, De), const, single_buffer),    # b1 / ln params
                _resident_spec((De, De), const, single_buffer),   # W2^T (resident)
                _resident_spec((5, De), const, single_buffer),    # b2 / bn params
            ],
            out_specs=pl.BlockSpec((bm, De), lambda i: (i, 0)),
        ),
        compiler_params=pltpu.CompilerParams(
            dimension_semantics=("parallel",),
            vmem_limit_bytes=vmem_limit),
    )


def _build_ntiled_call(kernel, out_shape, *, bm, Dr, De, tn, grid_m, grid_n,
                       vmem_limit, h_dtype, single_buffer):
    const = lambda i, j: (0, 0)
    return pl.pallas_call(
        kernel,
        out_shape=out_shape,
        grid_spec=pltpu.PrefetchScalarGridSpec(
            num_scalar_prefetch=0,
            grid=(grid_m, grid_n),
            in_specs=[
                pl.BlockSpec((bm, Dr), lambda i, j: (i, 0)),      # x row tile (constant over j)
                _resident_spec((Dr, De), const, single_buffer),   # W1^T (resident)
                _resident_spec((3, De), const, single_buffer),    # b1 / ln params
                pl.BlockSpec((De, tn), lambda i, j: (0, j)),      # W2^T column tile
                pl.BlockSpec((5, tn), lambda i, j: (0, j)),       # b2 / bn params tile
            ],
            out_specs=pl.BlockSpec((bm, tn), lambda i, j: (i, j)),
            scratch_shapes=[pltpu.VMEM((bm, De), h_dtype)],       # hidden act, resident over j
        ),
        compiler_params=pltpu.CompilerParams(
            dimension_semantics=("parallel", "arbitrary"),
            vmem_limit_bytes=vmem_limit),
    )


# ---------------------------------------------------------------------------
# wrapper
# ---------------------------------------------------------------------------
def nonlinear_projector(x, params, *, apply_layer_norm=False, apply_batch_norm=False,
                        block_m=256, block_n=512, mxu_dtype=jnp.bfloat16,
                        force_ntiled=False):
    """x: [B, dim_rep] -> [B, dim_embed]; eval-mode forward of NonLinearProjector."""
    B, dim_rep = x.shape
    dim_embed = params["w1"].shape[0]          # PyTorch nn.Linear layout: (out, in)
    out_dtype = x.dtype
    w_dtype = jnp.dtype(mxu_dtype)             # MXU operand dtype (bf16); accum stays f32

    # Lane-dense (multiple-of-128) feature dims.
    Dr = _round_up(dim_rep, 128)
    De = _round_up(dim_embed, 128)

    # Row tile: never split a small batch (only helps v7x megacore, hurts single-TC v5e/v6e
    # and collapses MXU height); large B naturally yields grid_m > 1 for the parallel axis.
    bm = max(8, min(_round_up(block_m, 8), _round_up(B, 8)))
    B_pad = _round_up(B, bm)
    grid_m = B_pad // bm

    # Per-TensorCore VMEM budget (v7x: 64 MiB/TC, v5e/v6e: 128 MiB) minus headroom.
    try:
        vmem_cap = int(pltpu.get_tpu_info().vmem_capacity_bytes)
    except Exception:
        vmem_cap = 64 << 20                    # conservative: smallest per-TC VMEM (v7x)
    budget = max(vmem_cap - (4 << 20), 16 << 20)

    single_buffer = _supports_pipeline_mode()
    n_wbuf = 1 if single_buffer else 2
    w_item = jnp.dtype(w_dtype).itemsize
    o_item = jnp.dtype(out_dtype).itemsize

    def fused_bytes(bm_, nwb):
        return (2 * bm_ * Dr * w_item                       # x tiles (double buffered)
                + 2 * bm_ * De * o_item                     # out tiles
                + nwb * (Dr * De + De * De) * w_item        # resident W1^T, W2^T
                + nwb * 8 * De * 4                          # param slabs
                + 2 * bm_ * De * 4)                         # live f32 h / y intermediates

    def ntiled_bytes(bm_, tn_, nwb):
        return (2 * bm_ * Dr * w_item                       # x tiles
                + nwb * Dr * De * w_item + nwb * 3 * De * 4  # resident W1^T + pvh
                + 2 * De * tn_ * w_item + 2 * 5 * tn_ * 4    # W2^T / pvy column tiles
                + 2 * bm_ * tn_ * o_item                     # out tiles
                + bm_ * De * w_item                          # h scratch
                + bm_ * De * 4 + 2 * bm_ * tn_ * 4)          # live f32 intermediates

    def pick_tn(start):
        t = max(128, min(De, (start // 128) * 128))
        while De % t:
            t -= 128
        return t

    use_ntiled = force_ntiled or fused_bytes(bm, n_wbuf) > 0.9 * budget
    if use_ntiled:
        tn = pick_tn(_round_up(block_n, 128))
        while tn > 128 and ntiled_bytes(bm, tn, n_wbuf) > 0.9 * budget:
            tn = pick_tn(tn // 2)
        while bm > 64 and ntiled_bytes(bm, tn, n_wbuf) > 0.9 * budget:
            bm = max(64, _round_up(bm // 2, 8))
        # TODO(synk): if W1^T alone exceeds per-core VMEM (huge dim_rep*dim_embed), fc1 would
        # additionally need K-tiling over dim_rep; not implemented here.
        B_pad = _round_up(B, bm)
        grid_m = B_pad // bm
        grid_n = De // tn
        working_cap = ntiled_bytes(bm, tn, 2)   # conservative (double-buffered) upper bound
    else:
        tn, grid_n = De, 1
        working_cap = fused_bytes(bm, 2)

    vmem_limit = int(min(max(working_cap * 1.25 + (4 << 20), 16 << 20), budget))

    # Zero-padded, pre-transposed, bf16 operands (plain-JAX glue, not the hot path).
    xp = jnp.zeros((B_pad, Dr), w_dtype).at[:B, :dim_rep].set(x.astype(w_dtype))
    w1t = jnp.zeros((Dr, De), w_dtype).at[:dim_rep, :dim_embed].set(
        params["w1"].T.astype(w_dtype))
    w2t = jnp.zeros((De, De), w_dtype).at[:dim_embed, :dim_embed].set(
        params["w2"].T.astype(w_dtype))

    pvh = jnp.zeros((3, De), jnp.float32)
    for row, name in ((_B1, "b1"), (_LN_G, "ln_gamma"), (_LN_B, "ln_beta")):
        if name in params:
            pvh = pvh.at[row, :dim_embed].set(params[name].astype(jnp.float32))
    pvy = jnp.zeros((5, De), jnp.float32).at[_BN_V, :].set(1.0)  # pad bn_var with 1
    for row, name in ((_B2, "b2"), (_BN_G, "bn_gamma"), (_BN_B, "bn_beta"),
                      (_BN_M, "bn_mean"), (_BN_V, "bn_var")):
        if name in params:
            pvy = pvy.at[row, :dim_embed].set(params[name].astype(jnp.float32))

    common = dict(apply_layer_norm=apply_layer_norm, apply_batch_norm=apply_batch_norm,
                  d_true=dim_embed, d_pad=De, ln_eps=1e-5, bn_eps=1e-5)
    out_shape = jax.ShapeDtypeStruct((B_pad, De), out_dtype)

    def run(single_buf):
        if use_ntiled:
            call = _build_ntiled_call(
                functools.partial(_ntiled_kernel, **common), out_shape,
                bm=bm, Dr=Dr, De=De, tn=tn, grid_m=grid_m, grid_n=grid_n,
                vmem_limit=vmem_limit, h_dtype=w_dtype, single_buffer=single_buf)
        else:
            call = _build_fused_call(
                functools.partial(_fused_kernel, **common), out_shape,
                bm=bm, Dr=Dr, De=De, grid_m=grid_m,
                vmem_limit=vmem_limit, single_buffer=single_buf)
        return call(xp, w1t, pvh, w2t, pvy)

    if single_buffer:
        try:
            out = run(True)
        except Exception:
            # pl.Buffered(1) rejected by this jax/Mosaic version: retry with default
            # double buffering.  A genuine failure (e.g. real VMEM OOM) differs from the
            # buffering mode and will re-raise from this retry instead of being swallowed.
            out = run(False)
    else:
        out = run(False)

    if B_pad != B or De != dim_embed:           # skip the de-padding copy when not needed
        out = out[:B, :dim_embed]
    return out


# ---------------------------------------------------------------------------
# reference + params
# ---------------------------------------------------------------------------
def _reference(x, params, apply_layer_norm=False, apply_batch_norm=False):
    h = x @ params["w1"].T + params["b1"]
    if apply_layer_norm:
        mu = jnp.mean(h, axis=-1, keepdims=True)
        var = jnp.mean((h - mu) ** 2, axis=-1, keepdims=True)
        h = (h - mu) / jnp.sqrt(var + 1e-5)
        h = h * params["ln_gamma"] + params["ln_beta"]
    h = 0.5 * h * (1.0 + lax.erf(h / jnp.sqrt(2.0)))
    y = h @ params["w2"].T + params["b2"]
    if apply_batch_norm:
        y = (y - params["bn_mean"]) / jnp.sqrt(params["bn_var"] + 1e-5)
        y = y * params["bn_gamma"] + params["bn_beta"]
    return y


def init_params(key, dim_rep, dim_embed):
    k1, k2, k3, k4 = jax.random.split(key, 4)
    bound1 = 1.0 / math.sqrt(dim_rep)
    bound2 = 1.0 / math.sqrt(dim_embed)
    return {
        # PyTorch nn.Linear layout: weight is (out_features, in_features)
        "w1": jax.random.uniform(k1, (dim_embed, dim_rep), jnp.float32, -bound1, bound1),
        "b1": jax.random.uniform(k2, (dim_embed,), jnp.float32, -bound1, bound1),
        "w2": jax.random.uniform(k3, (dim_embed, dim_embed), jnp.float32, -bound2, bound2),
        "b2": jax.random.uniform(k4, (dim_embed,), jnp.float32, -bound2, bound2),
        "ln_gamma": jnp.ones((dim_embed,), jnp.float32),
        "ln_beta": jnp.zeros((dim_embed,), jnp.float32),
        "bn_gamma": jnp.ones((dim_embed,), jnp.float32),
        "bn_beta": jnp.zeros((dim_embed,), jnp.float32),
        "bn_mean": jnp.zeros((dim_embed,), jnp.float32),
        "bn_var": jnp.ones((dim_embed,), jnp.float32),
    }


if __name__ == "__main__":
    key = jax.random.PRNGKey(0)
    kx, kp = jax.random.split(key)

    # fused (whole-weights-resident) path
    B, dim_rep, dim_embed = 16, 32, 32
    x = jax.random.normal(kx, (B, dim_rep), jnp.float32)
    params = init_params(kp, dim_rep, dim_embed)
    TOL = 3e-2  # bf16 MXU operands vs f32 reference
    for ln, bn in [(False, False), (True, False), (False, True)]:
        out = jax.block_until_ready(
            nonlinear_projector(x, params, apply_layer_norm=ln, apply_batch_norm=bn))
        ref = _reference(x, params, ln, bn)
        assert out.shape == (B, dim_embed), (out.shape, (B, dim_embed))
        err = float(jnp.max(jnp.abs(out - ref)))
        assert err < TOL, f"fused mismatch (ln={ln}, bn={bn}): max|d|={err}"

    # N-tiled fc2 path (used automatically when resident weights would not fit per-core VMEM,
    # e.g. v7x with large dim_embed); forced here at small shapes to validate it.
    B2, dr2, de2 = 16, 48, 256
    x2 = jax.random.normal(kx, (B2, dr2), jnp.float32)
    p2 = init_params(kp, dr2, de2)
    out2 = jax.block_until_ready(
        nonlinear_projector(x2, p2, apply_layer_norm=True, apply_batch_norm=True,
                            block_n=128, force_ntiled=True))
    ref2 = _reference(x2, p2, True, True)
    assert out2.shape == (B2, de2), (out2.shape, (B2, de2))
    err2 = float(jnp.max(jnp.abs(out2 - ref2)))
    assert err2 < TOL, f"ntiled mismatch: max|d|={err2}"

    print("KERNEL_OK")
</pallas_src>

<mosaic_0001>
module attributes {stable_mosaic.version = 11 : i64} {
  func.func @_fused_kernel(%arg0: i32, %arg1: memref<16x128xbf16, #tpu.memory_space<vmem>>, %arg2: memref<128x128xbf16, #tpu.memory_space<vmem>>, %arg3: memref<3x128xf32, #tpu.memory_space<vmem>>, %arg4: memref<128x128xbf16, #tpu.memory_space<vmem>>, %arg5: memref<5x128xf32, #tpu.memory_space<vmem>>, %arg6: memref<16x128xf32, #tpu.memory_space<vmem>>) attributes {dimension_semantics = [#tpu.dimension_semantics<parallel>], iteration_bounds = array<i64: 1>, scalar_prefetch = 0 : i64, scratch_operands = 0 : i64, tpu.core_type = #tpu.core_type<tc>, window_params = [{transform_indices = @transform_0, window_bounds = array<i64: 16, 128>}, {pipeline_mode = #tpu.pipeline_mode<synchronous>, transform_indices = @transform_1, window_bounds = array<i64: 128, 128>}, {pipeline_mode = #tpu.pipeline_mode<synchronous>, transform_indices = @transform_2, window_bounds = array<i64: 3, 128>}, {pipeline_mode = #tpu.pipeline_mode<synchronous>, transform_indices = @transform_3, window_bounds = array<i64: 128, 128>}, {pipeline_mode = #tpu.pipeline_mode<synchronous>, transform_indices = @transform_4, window_bounds = array<i64: 5, 128>}, {transform_indices = @transform_5, window_bounds = array<i64: 16, 128>}]} {
    %c0 = arith.constant 0 : index
    %c0_0 = arith.constant 0 : index
    %0 = vector.load %arg1[%c0, %c0_0] : memref<16x128xbf16, #tpu.memory_space<vmem>>, vector<16x128xbf16>
    %c0_1 = arith.constant 0 : index
    %c0_2 = arith.constant 0 : index
    %1 = vector.load %arg2[%c0_1, %c0_2] : memref<128x128xbf16, #tpu.memory_space<vmem>>, vector<128x128xbf16>
    %c0_3 = arith.constant 0 : index
    %c0_4 = arith.constant 0 : index
    %2 = vector.load %arg3[%c0_3, %c0_4] : memref<3x128xf32, #tpu.memory_space<vmem>>, vector<3x128xf32>
    %cst = arith.constant dense<0.000000e+00> : vector<16x128xf32>
    %3 = tpu.matmul %0, %1, %cst {dimension_numbers = #tpu.dot_dimension_numbers<[1], [0], [0], [1], [0, 0, 1, 1], [], []>} : vector<16x128xbf16>, vector<128x128xbf16>, vector<16x128xf32> -> vector<16x128xf32>
    %4 = vector.extract_strided_slice %2 {offsets = [0, 0], sizes = [1, 128], strides = [1, 1]} : vector<3x128xf32> to vector<1x128xf32>
    %5 = vector.broadcast %4 : vector<1x128xf32> to vector<16x128xf32>
    %6 = arith.addf %3, %5 : vector<16x128xf32>
    %cst_5 = arith.constant 5.000000e-01 : f32
    %7 = vector.broadcast %cst_5 : f32 to vector<16x128xf32>
    %8 = arith.mulf %7, %6 : vector<16x128xf32>
    %cst_6 = arith.constant 0.707106769 : f32
    %9 = vector.broadcast %cst_6 : f32 to vector<16x128xf32>
    %10 = arith.mulf %6, %9 : vector<16x128xf32>
    %11 = math.erf %10 : vector<16x128xf32>
    %cst_7 = arith.constant 1.000000e+00 : f32
    %12 = vector.broadcast %cst_7 : f32 to vector<16x128xf32>
    %13 = arith.addf %12, %11 : vector<16x128xf32>
    %14 = arith.mulf %8, %13 : vector<16x128xf32>
    %15 = arith.truncf %14 : vector<16x128xf32> to vector<16x128xbf16>
    %c0_8 = arith.constant 0 : index
    %c0_9 = arith.constant 0 : index
    %16 = vector.load %arg4[%c0_8, %c0_9] : memref<128x128xbf16, #tpu.memory_space<vmem>>, vector<128x128xbf16>
    %c0_10 = arith.constant 0 : index
    %c0_11 = arith.constant 0 : index
    %17 = vector.load %arg5[%c0_10, %c0_11] : memref<5x128xf32, #tpu.memory_space<vmem>>, vector<5x128xf32>
    %cst_12 = arith.constant dense<0.000000e+00> : vector<16x128xf32>
    %18 = tpu.matmul %15, %16, %cst_12 {dimension_numbers = #tpu.dot_dimension_numbers<[1], [0], [0], [1], [0, 0, 1, 1], [], []>} : vector<16x128xbf16>, vector<128x128xbf16>, vector<16x128xf32> -> vector<16x128xf32>
    %19 = vector.extract_strided_slice %17 {offsets = [0, 0], sizes = [1, 128], strides = [1, 1]} : vector<5x128xf32> to vector<1x128xf32>
    %20 = vector.broadcast %19 : vector<1x128xf32> to vector<16x128xf32>
    %21 = arith.addf %18, %20 : vector<16x128xf32>
    %c0_13 = arith.constant 0 : index
    %c0_14 = arith.constant 0 : index
    %22 = vector.load %arg6[%c0_13, %c0_14] : memref<16x128xf32, #tpu.memory_space<vmem>>, vector<16x128xf32>
    tpu.vector_store %arg6[%c0_13, %c0_14], %21 {strides = array<i32>} : memref<16x128xf32, #tpu.memory_space<vmem>>, vector<16x128xf32>,
    return
  }
  func.func @transform_0(%arg0: i32) -> (i32, i32) {
    %c0_i32 = arith.constant 0 : i32
    %c0_i32_0 = arith.constant 0 : i32
    return %arg0, %c0_i32 : i32, i32
  }
  func.func @transform_1(%arg0: i32) -> (i32, i32) {
    %c0_i32 = arith.constant 0 : i32
    %c0_i32_0 = arith.constant 0 : i32
    %c0_i32_1 = arith.constant 0 : i32
    return %c0_i32, %c0_i32_0 : i32, i32
  }
  func.func @transform_2(%arg0: i32) -> (i32, i32) {
    %c0_i32 = arith.constant 0 : i32
    %c0_i32_0 = arith.constant 0 : i32
    %c0_i32_1 = arith.constant 0 : i32
    return %c0_i32, %c0_i32_0 : i32, i32
  }
  func.func @transform_3(%arg0: i32) -> (i32, i32) {
    %c0_i32 = arith.constant 0 : i32
    %c0_i32_0 = arith.constant 0 : i32
    %c0_i32_1 = arith.constant 0 : i32
    return %c0_i32, %c0_i32_0 : i32, i32
  }
  func.func @transform_4(%arg0: i32) -> (i32, i32) {
    %c0_i32 = arith.constant 0 : i32
    %c0_i32_0 = arith.constant 0 : i32
    %c0_i32_1 = arith.constant 0 : i32
    return %c0_i32, %c0_i32_0 : i32, i32
  }
  func.func @transform_5(%arg0: i32) -> (i32, i32) {
    %c0_i32 = arith.constant 0 : i32
    %c0_i32_0 = arith.constant 0 : i32
    return %arg0, %c0_i32 : i32, i32
  }
}

module attributes {stable_mosaic.version = 11 : i64} {
  func.func @_fused_kernel(%arg0: i32, %arg1: memref<16x128xbf16, #tpu.memory_space<vmem>>, %arg2: memref<128x128xbf16, #tpu.memory_space<vmem>>, %arg3: memref<3x128xf32, #tpu.memory_space<vmem>>, %arg4: memref<128x128xbf16, #tpu.memory_space<vmem>>, %arg5: memref<5x128xf32, #tpu.memory_space<vmem>>, %arg6: memref<16x128xf32, #tpu.memory_space<vmem>>) attributes {dimension_semantics = [#tpu.dimension_semantics<parallel>], iteration_bounds = array<i64: 1>, scalar_prefetch = 0 : i64, scratch_operands = 0 : i64, tpu.core_type = #tpu.core_type<tc>, window_params = [{transform_indices = @transform_0, window_bounds = array<i64: 16, 128>}, {pipeline_mode = #tpu.pipeline_mode<synchronous>, transform_indices = @transform_1, window_bounds = array<i64: 128, 128>}, {pipeline_mode = #tpu.pipeline_mode<synchronous>, transform_indices = @transform_2, window_bounds = array<i64: 3, 128>}, {pipeline_mode = #tpu.pipeline_mode<synchronous>, transform_indices = @transform_3, window_bounds = array<i64: 128, 128>}, {pipeline_mode = #tpu.pipeline_mode<synchronous>, transform_indices = @transform_4, window_bounds = array<i64: 5, 128>}, {transform_indices = @transform_5, window_bounds = array<i64: 16, 128>}]} {
    %c0 = arith.constant 0 : index
    %c0_0 = arith.constant 0 : index
    %0 = vector.load %arg1[%c0, %c0_0] : memref<16x128xbf16, #tpu.memory_space<vmem>>, vector<16x128xbf16>
    %c0_1 = arith.constant 0 : index
    %c0_2 = arith.constant 0 : index
    %1 = vector.load %arg2[%c0_1, %c0_2] : memref<128x128xbf16, #tpu.memory_space<vmem>>, vector<128x128xbf16>
    %c0_3 = arith.constant 0 : index
    %c0_4 = arith.constant 0 : index
    %2 = vector.load %arg3[%c0_3, %c0_4] : memref<3x128xf32, #tpu.memory_space<vmem>>, vector<3x128xf32>
    %cst = arith.constant dense<0.000000e+00> : vector<16x128xf32>
    %3 = tpu.matmul %0, %1, %cst {dimension_numbers = #tpu.dot_dimension_numbers<[1], [0], [0], [1], [0, 0, 1, 1], [], []>} : vector<16x128xbf16>, vector<128x128xbf16>, vector<16x128xf32> -> vector<16x128xf32>
    %4 = vector.extract_strided_slice %2 {offsets = [0, 0], sizes = [1, 128], strides = [1, 1]} : vector<3x128xf32> to vector<1x128xf32>
    %5 = vector.broadcast %4 : vector<1x128xf32> to vector<16x128xf32>
    %6 = arith.addf %3, %5 : vector<16x128xf32>
    %cst_5 = arith.constant 5.000000e-01 : f32
    %7 = vector.broadcast %cst_5 : f32 to vector<16x128xf32>
    %8 = arith.mulf %7, %6 : vector<16x128xf32>
    %cst_6 = arith.constant 0.707106769 : f32
    %9 = vector.broadcast %cst_6 : f32 to vector<16x128xf32>
    %10 = arith.mulf %6, %9 : vector<16x128xf32>
    %11 = math.erf %10 : vector<16x128xf32>
    %cst_7 = arith.constant 1.000000e+00 : f32
    %12 = vector.broadcast %cst_7 : f32 to vector<16x128xf32>
    %13 = arith.addf %12, %11 : vector<16x128xf32>
    %14 = arith.mulf %8, %13 : vector<16x128xf32>
    %15 = arith.truncf %14 : vector<16x128xf32> to vector<16x128xbf16>
    %c0_8 = arith.constant 0 : index
    %c0_9 = arith.constant 0 : index
    %16 = vector.load %arg4[%c0_8, %c0_9] : memref<128x128xbf16, #tpu.memory_space<vmem>>, vector<128x128xbf16>
    %c0_10 = arith.constant 0 : index
    %c0_11 = arith.constant 0 : index
    %17 = vector.load %arg5[%c0_10, %c0_11] : memref<5x128xf32, #tpu.memory_space<vmem>>, vector<5x128xf32>
    %cst_12 = arith.constant dense<0.000000e+00> : vector<16x128xf32>
    %18 = tpu.matmul %15, %16, %cst_12 {dimension_numbers = #tpu.dot_dimension_numbers<[1], [0], [0], [1], [0, 0, 1, 1], [], []>} : vector<16x128xbf16>, vector<128x128xbf16>, vector<16x128xf32> -> vector<16x128xf32>
    %19 = vector.extract_strided_slice %17 {offsets = [0, 0], sizes = [1, 128], strides = [1, 1]} : vector<5x128xf32> to vector<1x128xf32>
    %20 = vector.broadcast %19 : vector<1x128xf32> to vector<16x128xf32>
    %21 = arith.addf %18, %20 : vector<16x128xf32>
    %c0_13 = arith.constant 0 : index
    %c0_14 = arith.constant 0 : index
    %22 = vector.load %arg6[%c0_13, %c0_14] : memref<16x128xf32, #tpu.memory_space<vmem>>, vector<16x128xf32>
    tpu.vector_store %arg6[%c0_13, %c0_14], %21 {strides = array<i32>} : memref<16x128xf32, #tpu.memory_space<vmem>>, vector<16x128xf32>,
    return
  }
  func.func @transform_0(%arg0: i32) -> (i32, i32) {
    %c0_i32 = arith.constant 0 : i32
    %c0_i32_0 = arith.constant 0 : i32
    return %arg0, %c0_i32 : i32, i32
  }
  func.func @transform_1(%arg0: i32) -> (i32, i32) {
    %c0_i32 = arith.constant 0 : i32
    %c0_i32_0 = arith.constant 0 : i32
    %c0_i32_1 = arith.constant 0 : i32
    return %c0_i32, %c0_i32_0 : i32, i32
  }
  func.func @transform_2(%arg0: i32) -> (i32, i32) {
    %c0_i32 = arith.constant 0 : i32
    %c0_i32_0 = arith.constant 0 : i32
    %c0_i32_1 = arith.constant 0 : i32
    return %c0_i32, %c0_i32_0 : i32, i32
  }
  func.func @transform_3(%arg0: i32) -> (i32, i32) {
    %c0_i32 = arith.constant 0 : i32
    %c0_i32_0 = arith.constant 0 : i32
    %c0_i32_1 = arith.constant 0 : i32
    return %c0_i32, %c0_i32_0 : i32, i32
  }
  func.func @transform_4(%arg0: i32) -> (i32, i32) {
    %c0_i32 = arith.constant 0 : i32
    %c0_i32_0 = arith.constant 0 : i32
    %c0_i32_1 = arith.constant 0 : i32
    return %c0_i32, %c0_i32_0 : i32, i32
  }
  func.func @transform_5(%arg0: i32) -> (i32, i32) {
    %c0_i32 = arith.constant 0 : i32
    %c0_i32_0 = arith.constant 0 : i32
    return %arg0, %c0_i32 : i32, i32
  }
}

</mosaic_0001>

<llo_original>
// kernel: tpu_custom_call.1
$region0: #{tpu_custom_call.1}
  #allocation0 [shape = 'u32[]', space=smem, size = 0x4, offset = 0x4, fixed_abs, tag = 'smem constant byte address 0x4 - core index']
  #allocation1 [shape = 'u32[72,128]{1,0:T(1,128)}', space=vmem, size = 0x9000, scoped, tag = 'internal scratch']
  %s0 = inlined_call_operand.hbm [shape: bf16[16,128], index: 0, kind: input, shape index: {}]
  %s1 = inlined_call_operand.hbm [shape: bf16[128,128], index: 1, kind: input, shape index: {}]
  %s2 = inlined_call_operand.hbm [shape: f32[3,128], index: 2, kind: input, shape index: {}]
  %s3 = inlined_call_operand.hbm [shape: bf16[128,128], index: 3, kind: input, shape index: {}]
  %s4 = inlined_call_operand.hbm [shape: f32[5,128], index: 4, kind: input, shape index: {}]
  %s5 = inlined_call_operand.hbm [shape: f32[16,128], index: 5, kind: output, shape index: {}]
  %s6 = sld [smem:[#allocation0]]
  $region50: #{tpu_custom_call.1} parent=0
    _
  %s8 = ssub.s32 1, %s6
  %s9 = scalar_select 0, %s8, %s6
  $region1: #{tpu_custom_call.1} parent=0
    #allocation2 [shape = 'u8[4096]{0}', space=vmem, size = 0x1000, scoped, tag = 'input window, operand 0, single buffered']
    #allocation3 [shape = 's32[1]{0}', space=sflag, size = 0x4, scoped, tag = 'scoped memory for tpu_custom_call.1']
    #allocation4 [shape = 's32[1]{0}', space=sflag, size = 0x4, scoped, tag = 'scoped memory for tpu_custom_call.1']
    #allocation5 [shape = 'u8[32768]{0}', space=vmem, size = 0x8000, scoped, tag = 'input window, operand 1, single buffered']
    #allocation6 [shape = 's32[1]{0}', space=sflag, size = 0x4, scoped, tag = 'scoped memory for tpu_custom_call.1']
    #allocation7 [shape = 'u8[2048]{0}', space=vmem, size = 0x800, scoped, tag = 'input window, operand 2, single buffered']
    #allocation8 [shape = 'u8[32768]{0}', space=vmem, size = 0x8000, scoped, tag = 'input window, operand 3, single buffered']
    #allocation9 [shape = 's32[1]{0}', space=sflag, size = 0x4, scoped, tag = 'scoped memory for tpu_custom_call.1']
    #allocation10 [shape = 'u8[4096]{0}', space=vmem, size = 0x1000, scoped, tag = 'input window, operand 4, single buffered']
    #allocation11 [shape = 'u8[8192]{0}', space=vmem, size = 0x2000, scoped, tag = 'output window, operand 0, single buffered']
    %10 = vsyncpa [#allocation3], 0
    %11 = vsyncpa [#allocation6], 0
    %12 = vsyncpa [#allocation9], 0
    %13 = vsyncpa [#allocation4], 0
    // Predicated region
    $region2: #{tpu_custom_call.1} parent=1 // pred_check
      _
    $region3: #{tpu_custom_call.1} parent=1 // pred_check_branch
      %15 = sbr.rel (0) target = $region5
    $region4: #{tpu_custom_call.1} parent=1 // pred_region
      %17 = vsyncadd [#allocation3], 0
      %s18 = sshll.u32 %s0, 4
      %s19 = int_to_ptr.hbm [resolvable:$true] %s18
      %s20 = sshll.u32 [#allocation2], 4
      %s21 = int_to_ptr.vmem [resolvable:$true] %s20
      %26 = dma.hbm_to_vmem [thread:$0]  %s19, 128, %s21, [#allocation3], 64, 64, 4
    $region5: #{tpu_custom_call.1} parent=1 // pred_fallthru
      _
    // Predicated region
    $region6: #{tpu_custom_call.1} parent=1 // pred_check
      _
    $region7: #{tpu_custom_call.1} parent=1 // pred_check_branch
      %28 = sbr.rel (0) target = $region9
    $region8: #{tpu_custom_call.1} parent=1 // pred_region
      %30 = vsyncadd [#allocation6], 0
      %s31 = sshll.u32 %s1, 4
      %s32 = int_to_ptr.hbm [resolvable:$true] %s31
      %s33 = sshll.u32 [#allocation5], 4
      %s34 = int_to_ptr.vmem [resolvable:$true] %s33
      %39 = dma.hbm_to_vmem [thread:$0]  %s32, 1024, %s34, [#allocation6], 64, 64, 4
    $region9: #{tpu_custom_call.1} parent=1 // pred_fallthru
      _
    // Predicated region
    $region10: #{tpu_custom_call.1} parent=1 // pred_check
      _
    $region11: #{tpu_custom_call.1} parent=1 // pred_check_branch
      %41 = sbr.rel (0) target = $region13
    $region12: #{tpu_custom_call.1} parent=1 // pred_region
      %43 = vsyncadd [#allocation6], 0
      %s45 = sshll.u32 %s2, 4
      %s46 = int_to_ptr.hbm [resolvable:$true] %s45
      %s47 = sshll.u32 [#allocation7], 4
      %s48 = int_to_ptr.vmem [resolvable:$true] %s47
      %50 = dma.hbm_to_vmem [thread:$0]  %s46, 64, %s48, [#allocation6]
    $region13: #{tpu_custom_call.1} parent=1 // pred_fallthru
      _
    // Predicated region
    $region14: #{tpu_custom_call.1} parent=1 // pred_check
      _
    $region15: #{tpu_custom_call.1} parent=1 // pred_check_branch
      %52 = sbr.rel (0) target = $region17
    $region16: #{tpu_custom_call.1} parent=1 // pred_region
      %54 = vsyncadd [#allocation9], 0
      %s55 = sshll.u32 %s3, 4
      %s56 = int_to_ptr.hbm [resolvable:$true] %s55
      %s57 = sshll.u32 [#allocation8], 4
      %s58 = int_to_ptr.vmem [resolvable:$true] %s57
      %63 = dma.hbm_to_vmem [thread:$0]  %s56, 1024, %s58, [#allocation9], 64, 64, 4
    $region17: #{tpu_custom_call.1} parent=1 // pred_fallthru
      _
    // Predicated region
    $region18: #{tpu_custom_call.1} parent=1 // pred_check
      _
    $region19: #{tpu_custom_call.1} parent=1 // pred_check_branch
      %65 = sbr.rel (0) target = $region21
    $region20: #{tpu_custom_call.1} parent=1 // pred_region
      %67 = vsyncadd [#allocation9], 0
      %s69 = sshll.u32 %s4, 4
      %s70 = int_to_ptr.hbm [resolvable:$true] %s69
      %s71 = sshll.u32 [#allocation10], 4
      %s72 = int_to_ptr.vmem [resolvable:$true] %s71
      %74 = dma.hbm_to_vmem [thread:$0]  %s70, 128, %s72, [#allocation9]
    $region21: #{tpu_custom_call.1} parent=1 // pred_fallthru
      _
    // Predicated region
    $region22: #{tpu_custom_call.1} parent=1 // pred_check
      _
    $region23: #{tpu_custom_call.1} parent=1 // pred_check_branch
      %76 = sbr.rel (0) target = $region25
    $region24: #{tpu_custom_call.1} parent=1 // pred_region
      %78 = dma.done [#allocation3], 128
    $region25: #{tpu_custom_call.1} parent=1 // pred_fallthru
      _
    // Predicated region
    $region26: #{tpu_custom_call.1} parent=1 // pred_check
      _
    $region27: #{tpu_custom_call.1} parent=1 // pred_check_branch
      %80 = sbr.rel (0) target = $region29
    $region28: #{tpu_custom_call.1} parent=1 // pred_region
      %82 = dma.done [#allocation6], 1024
    $region29: #{tpu_custom_call.1} parent=1 // pred_fallthru
      _
    // Predicated region
    $region30: #{tpu_custom_call.1} parent=1 // pred_check
      _
    $region31: #{tpu_custom_call.1} parent=1 // pred_check_branch
      %84 = sbr.rel (0) target = $region33
    $region32: #{tpu_custom_call.1} parent=1 // pred_region
      %86 = dma.done [#allocation6], 64
    $region33: #{tpu_custom_call.1} parent=1 // pred_fallthru
      _
    // Predicated region
    $region34: #{tpu_custom_call.1} parent=1 // pred_check
      _
    $region35: #{tpu_custom_call.1} parent=1 // pred_check_branch
      %88 = sbr.rel (0) target = $region37
    $region36: #{tpu_custom_call.1} parent=1 // pred_region
      %90 = dma.done [#allocation9], 1024
    $region37: #{tpu_custom_call.1} parent=1 // pred_fallthru
      _
    // Predicated region
    $region38: #{tpu_custom_call.1} parent=1 // pred_check
      _
    $region39: #{tpu_custom_call.1} parent=1 // pred_check_branch
      %92 = sbr.rel (0) target = $region41
    $region40: #{tpu_custom_call.1} parent=1 // pred_region
      %94 = dma.done [#allocation9], 128
    $region41: #{tpu_custom_call.1} parent=1 // pred_fallthru
      _
    %v95 = vld [vmem:[#allocation2] sm:$0xf]
    %v96 = vld [vmem:[#allocation2 + $0x4] sm:$0xf]
    %v97 = vld [vmem:[#allocation5] sm:$0xf]
    %v98 = vld [vmem:[#allocation5 + $0x4] sm:$0xf]
    %v99 = vld [vmem:[#allocation5 + $0x8] sm:$0xf]
    %v100 = vld [vmem:[#allocation5 + $0xc] sm:$0xf]
    %v101 = vld [vmem:[#allocation5 + $0x10] sm:$0xf]
    %v102 = vld [vmem:[#allocation5 + $0x14] sm:$0xf]
    %v103 = vld [vmem:[#allocation5 + $0x18] sm:$0xf]
    %v104 = vld [vmem:[#allocation5 + $0x1c] sm:$0xf]
    %v105 = vld [vmem:[#allocation5 + $0x20] sm:$0xf]
    %v106 = vld [vmem:[#allocation5 + $0x24] sm:$0xf]
    %v107 = vld [vmem:[#allocation5 + $0x28] sm:$0xf]
    %v108 = vld [vmem:[#allocation5 + $0x2c] sm:$0xf]
    %v109 = vld [vmem:[#allocation5 + $0x30] sm:$0xf]
    %v110 = vld [vmem:[#allocation5 + $0x34] sm:$0xf]
    %v111 = vld [vmem:[#allocation5 + $0x38] sm:$0xf]
    %v112 = vld [vmem:[#allocation5 + $0x3c] sm:$0xf]
    %v113 = vld [vmem:[#allocation7] sm:$0x7]
    %v114 = vperm.slane %v113, 0
    %v117 = vunpack.c.l.b16 %v95
    %v118 = vunpack.c.l.b16 %v96
    %v119 = vpack.c.b16 %v118, %v117
    %v137 = vunpack.c.l.b16 %v97
    %v138 = vunpack.c.l.b16 %v98
    %v139 = vunpack.c.l.b16 %v99
    %v140 = vunpack.c.l.b16 %v100
    %v141 = vunpack.c.l.b16 %v101
    %v142 = vunpack.c.l.b16 %v102
    %v143 = vunpack.c.l.b16 %v103
    %v144 = vunpack.c.l.b16 %v104
    %v145 = vunpack.c.l.b16 %v105
    %v146 = vunpack.c.l.b16 %v106
    %v147 = vunpack.c.l.b16 %v107
    %v148 = vunpack.c.l.b16 %v108
    %v149 = vunpack.c.l.b16 %v109
    %v150 = vunpack.c.l.b16 %v110
    %v151 = vunpack.c.l.b16 %v111
    %v152 = vunpack.c.l.b16 %v112
    %v153 = vpack.c.b16 %v138, %v137
    %v154 = vpack.c.b16 %v140, %v139
    %v155 = vpack.c.b16 %v142, %v141
    %v156 = vpack.c.b16 %v144, %v143
    %v157 = vpack.c.b16 %v146, %v145
    %v158 = vpack.c.b16 %v148, %v147
    %v159 = vpack.c.b16 %v150, %v149
    %v160 = vpack.c.b16 %v152, %v151
    %169 = vmatpush.bf16.msra.mxu0 %v160
    %170 = vmatpush.bf16.msra.mxu0 %v159
    %171 = vmatpush.bf16.msra.mxu0 %v158
    %172 = vmatpush.bf16.msra.mxu0 %v157
    %173 = vmatpush.bf16.msra.mxu0 %v156
    %174 = vmatpush.bf16.msra.mxu0 %v155
    %175 = vmatpush.bf16.msra.mxu0 %v154
    %176 = vmatpush.bf16.msra.mxu0 %v153
    %177 = vmatmul.bf16.gmra.mxu0 %v119
    %v178 = vpop.f32.mrf.mxu0
    %v179 = vadd.f32 %v114, %v178
    %v180 = vpop.f32.mrf.mxu0
    %v181 = vadd.f32 %v114, %v180
    %182 = vdwg.mxu0
    %v183 = vmul.f32 %v179, 0.5
    %v184 = vmul.f32 %v181, 0.5
    %v185 = vmul.f32 %v179, 0.70710677
    %v186 = vmul.f32 %v181, 0.70710677
    %v187 = vmul.f32 %v185, %v185
    %v188 = vmin.f32 16.0, %v187
    %v189 = vmul.f32 %v188, 2.1237322e-06
    %v190 = vadd.f32 %v189, 0.00028619796
    %v191 = vmul.f32 %v188, %v190
    %v192 = vadd.f32 %v191, 0.0036580483
    %v193 = vmul.f32 %v188, %v192
    %v194 = vadd.f32 %v193, 0.05243302
    %v195 = vmul.f32 %v188, %v194
    %v196 = vadd.f32 %v195, 0.18741608
    %v197 = vmul.f32 %v188, %v196
    %v198 = vadd.f32 %v197, 1.1283791
    %v199 = vmul.f32 %v185, %v198
    %v200 = vmul.f32 %v188, 3.8918573e-05
    %v201 = vadd.f32 %v200, 0.001143296
    %v202 = vmul.f32 %v188, %v201
    %v203 = vadd.f32 %v202, 0.014752088
    %v204 = vmul.f32 %v188, %v203
    %v205 = vadd.f32 %v204, 0.112945676
    %v206 = vmul.f32 %v188, %v205
    %v207 = vadd.f32 %v206, 0.4994258
    %v208 = vmul.f32 %v188, %v207
    %v209 = vadd.f32 %v208, 1.0
    %v210 = vrcp.pop %v209
    %v211 = vmul.f32 %v209, %v210
    %v212 = vsub.f32 1.0, %v211
    %v213 = vmul.f32 %v210, %v212
    %v214 = vadd.f32 %v210, %v213
    %vm215 = vweird.f32 %v209
    %vm216 = vweird.f32 %v210
    %vm217 = vmor %vm215, %vm216
    %v218 = vsel %vm217, %v210, %v214
    %v219 = vand.u32 2147483647, %v209
    %vm220 = vcmp.eq.f32.partialorder %v219, 8.507059e+37
    %v221 = vand.u32 %v209, 2147483648
    %v222 = vor.u32 1.1754944e-38, %v221
    %v223 = vsel %vm220, %v222, %v218
    %v224 = vmul.f32 %v199, %v223
    %v225 = vmin.f32 %v224, 1.0
    %v226 = vmax.f32 %v225, -1.0
    %v227 = vmul.f32 %v186, %v186
    %v228 = vmin.f32 16.0, %v227
    %v229 = vmul.f32 %v228, 2.1237322e-06
    %v230 = vadd.f32 %v229, 0.00028619796
    %v231 = vmul.f32 %v228, %v230
    %v232 = vadd.f32 %v231, 0.0036580483
    %v233 = vmul.f32 %v228, %v232
    %v234 = vadd.f32 %v233, 0.05243302
    %v235 = vmul.f32 %v228, %v234
    %v236 = vadd.f32 %v235, 0.18741608
    %v237 = vmul.f32 %v228, %v236
    %v238 = vadd.f32 %v237, 1.1283791
    %v239 = vmul.f32 %v186, %v238
    %v240 = vmul.f32 %v228, 3.8918573e-05
    %v241 = vadd.f32 %v240, 0.001143296
    %v242 = vmul.f32 %v228, %v241
    %v243 = vadd.f32 %v242, 0.014752088
    %v244 = vmul.f32 %v228, %v243
    %v245 = vadd.f32 %v244, 0.112945676
    %v246 = vmul.f32 %v228, %v245
    %v247 = vadd.f32 %v246, 0.4994258
    %v248 = vmul.f32 %v228, %v247
    %v249 = vadd.f32 %v248, 1.0
    %v250 = vrcp.pop %v249
    %v251 = vmul.f32 %v249, %v250
    %v252 = vsub.f32 1.0, %v251
    %v253 = vmul.f32 %v250, %v252
    %v254 = vadd.f32 %v250, %v253
    %vm255 = vweird.f32 %v249
    %vm256 = vweird.f32 %v250
    %vm257 = vmor %vm255, %vm256
    %v258 = vsel %vm257, %v250, %v254
    %v259 = vand.u32 2147483647, %v249
    %vm260 = vcmp.eq.f32.partialorder %v259, 8.507059e+37
    %v261 = vand.u32 %v249, 2147483648
    %v262 = vor.u32 1.1754944e-38, %v261
    %v263 = vsel %vm260, %v262, %v258
    %v264 = vmul.f32 %v239, %v263
    %v265 = vmin.f32 %v264, 1.0
    %v266 = vmax.f32 %v265, -1.0
    %v267 = vadd.f32 %v226, 1.0
    %v268 = vadd.f32 %v266, 1.0
    %v269 = vmul.f32 %v183, %v267
    %v270 = vmul.f32 %v184, %v268
    %v271 = vpack.c.bf16 %v270, %v269
    %v272 = vld [vmem:[#allocation8] sm:$0xf]
    %v273 = vld [vmem:[#allocation8 + $0x4] sm:$0xf]
    %v274 = vld [vmem:[#allocation8 + $0x8] sm:$0xf]
    %v275 = vld [vmem:[#allocation8 + $0xc] sm:$0xf]
    %v276 = vld [vmem:[#allocation8 + $0x10] sm:$0xf]
    %v277 = vld [vmem:[#allocation8 + $0x14] sm:$0xf]
    %v278 = vld [vmem:[#allocation8 + $0x18] sm:$0xf]
    %v279 = vld [vmem:[#allocation8 + $0x1c] sm:$0xf]
    %v280 = vld [vmem:[#allocation8 + $0x20] sm:$0xf]
    %v281 = vld [vmem:[#allocation8 + $0x24] sm:$0xf]
    %v282 = vld [vmem:[#allocation8 + $0x28] sm:$0xf]
    %v283 = vld [vmem:[#allocation8 + $0x2c] sm:$0xf]
    %v284 = vld [vmem:[#allocation8 + $0x30] sm:$0xf]
    %v285 = vld [vmem:[#allocation8 + $0x34] sm:$0xf]
    %v286 = vld [vmem:[#allocation8 + $0x38] sm:$0xf]
    %v287 = vld [vmem:[#allocation8 + $0x3c] sm:$0xf]
    %v288 = vld [vmem:[#allocation10] sm:$0x1f]
    %v289 = vperm.slane %v288, 0
    %v306 = vunpack.c.l.b16 %v272
    %v307 = vunpack.c.l.b16 %v273
    %v308 = vunpack.c.l.b16 %v274
    %v309 = vunpack.c.l.b16 %v275
    %v310 = vunpack.c.l.b16 %v276
    %v311 = vunpack.c.l.b16 %v277
    %v312 = vunpack.c.l.b16 %v278
    %v313 = vunpack.c.l.b16 %v279
    %v314 = vunpack.c.l.b16 %v280
    %v315 = vunpack.c.l.b16 %v281
    %v316 = vunpack.c.l.b16 %v282
    %v317 = vunpack.c.l.b16 %v283
    %v318 = vunpack.c.l.b16 %v284
    %v319 = vunpack.c.l.b16 %v285
    %v320 = vunpack.c.l.b16 %v286
    %v321 = vunpack.c.l.b16 %v287
    %v322 = vpack.c.b16 %v307, %v306
    %v323 = vpack.c.b16 %v309, %v308
    %v324 = vpack.c.b16 %v311, %v310
    %v325 = vpack.c.b16 %v313, %v312
    %v326 = vpack.c.b16 %v315, %v314
    %v327 = vpack.c.b16 %v317, %v316
    %v328 = vpack.c.b16 %v319, %v318
    %v329 = vpack.c.b16 %v321, %v320
    %338 = vmatpush.bf16.msra.mxu0 %v329
    %339 = vmatpush.bf16.msra.mxu0 %v328
    %340 = vmatpush.bf16.msra.mxu0 %v327
    %341 = vmatpush.bf16.msra.mxu0 %v326
    %342 = vmatpush.bf16.msra.mxu0 %v325
    %343 = vmatpush.bf16.msra.mxu0 %v324
    %344 = vmatpush.bf16.msra.mxu0 %v323
    %345 = vmatpush.bf16.msra.mxu0 %v322
    %346 = vmatmul.bf16.gmra.mxu0 %v271
    %v347 = vpop.f32.mrf.mxu0
    %v348 = vadd.f32 %v289, %v347
    %v349 = vpop.f32.mrf.mxu0
    %v350 = vadd.f32 %v289, %v349
    %351 = vdwg.mxu0
    %352 = vst [vmem:[#allocation11] sm:$0xff] %v348
    %353 = vst [vmem:[#allocation11 + $0x8] sm:$0xff] %v350
    // Predicated region
    $region42: #{tpu_custom_call.1} parent=1 // pred_check
      _
    $region43: #{tpu_custom_call.1} parent=1 // pred_check_branch
      %355 = sbr.rel (0) target = $region45
    $region44: #{tpu_custom_call.1} parent=1 // pred_region
      %357 = vsyncadd [#allocation4], 0
      %s358 = sshll.u32 [#allocation11], 4
      %s359 = int_to_ptr.vmem [resolvable:$true] %s358
      %s360 = sshll.u32 %s5, 4
      %s361 = int_to_ptr.hbm [resolvable:$true] %s360
      %366 = dma.vmem_to_hbm [thread:$0]  %s359, 256, %s361, [#allocation4], 128, 128, 8
    $region45: #{tpu_custom_call.1} parent=1 // pred_fallthru
      _
    // Predicated region
    $region46: #{tpu_custom_call.1} parent=1 // pred_check
      _
    $region47: #{tpu_custom_call.1} parent=1 // pred_check_branch
      %368 = sbr.rel (0) target = $region49
    $region48: #{tpu_custom_call.1} parent=1 // pred_region
      %370 = dma.done [#allocation4], 256
    $region49: #{tpu_custom_call.1} parent=1 // pred_fallthru
      _
    %371 = vsyncpa [#allocation3], 1
    %372 = vsyncpa [#allocation6], 1
    %373 = vsyncpa [#allocation9], 1
    %374 = vsyncpa [#allocation4], 1

// kernel: tpu_custom_call.1
$region0: #{tpu_custom_call.1}
  #allocation0 [shape = 'u32[]', space=smem, size = 0x4, offset = 0x4, fixed_abs, tag = 'smem constant byte address 0x4 - core index']
  #allocation1 [shape = 'u32[72,128]{1,0:T(1,128)}', space=vmem, size = 0x9000, scoped, tag = 'internal scratch']
  %s0 = inlined_call_operand.hbm [shape: bf16[16,128], index: 0, kind: input, shape index: {}]
  %s1 = inlined_call_operand.hbm [shape: bf16[128,128], index: 1, kind: input, shape index: {}]
  %s2 = inlined_call_operand.hbm [shape: f32[3,128], index: 2, kind: input, shape index: {}]
  %s3 = inlined_call_operand.hbm [shape: bf16[128,128], index: 3, kind: input, shape index: {}]
  %s4 = inlined_call_operand.hbm [shape: f32[5,128], index: 4, kind: input, shape index: {}]
  %s5 = inlined_call_operand.hbm [shape: f32[16,128], index: 5, kind: output, shape index: {}]
  %s6 = sld [smem:[#allocation0]]
  $region50: #{tpu_custom_call.1} parent=0
    _
  %s8 = ssub.s32 1, %s6
  %s9 = scalar_select 0, %s8, %s6
  $region1: #{tpu_custom_call.1} parent=0
    #allocation2 [shape = 'u8[4096]{0}', space=vmem, size = 0x1000, scoped, tag = 'input window, operand 0, single buffered']
    #allocation3 [shape = 's32[1]{0}', space=sflag, size = 0x4, scoped, tag = 'scoped memory for tpu_custom_call.1']
    #allocation4 [shape = 's32[1]{0}', space=sflag, size = 0x4, scoped, tag = 'scoped memory for tpu_custom_call.1']
    #allocation5 [shape = 'u8[32768]{0}', space=vmem, size = 0x8000, scoped, tag = 'input window, operand 1, single buffered']
    #allocation6 [shape = 's32[1]{0}', space=sflag, size = 0x4, scoped, tag = 'scoped memory for tpu_custom_call.1']
    #allocation7 [shape = 'u8[2048]{0}', space=vmem, size = 0x800, scoped, tag = 'input window, operand 2, single buffered']
    #allocation8 [shape = 'u8[32768]{0}', space=vmem, size = 0x8000, scoped, tag = 'input window, operand 3, single buffered']
    #allocation9 [shape = 's32[1]{0}', space=sflag, size = 0x4, scoped, tag = 'scoped memory for tpu_custom_call.1']
    #allocation10 [shape = 'u8[4096]{0}', space=vmem, size = 0x1000, scoped, tag = 'input window, operand 4, single buffered']
    #allocation11 [shape = 'u8[8192]{0}', space=vmem, size = 0x2000, scoped, tag = 'output window, operand 0, single buffered']
    %10 = vsyncpa [#allocation3], 0
    %11 = vsyncpa [#allocation6], 0
    %12 = vsyncpa [#allocation9], 0
    %13 = vsyncpa [#allocation4], 0
    // Predicated region
    $region2: #{tpu_custom_call.1} parent=1 // pred_check
      _
    $region3: #{tpu_custom_call.1} parent=1 // pred_check_branch
      %15 = sbr.rel (0) target = $region5
    $region4: #{tpu_custom_call.1} parent=1 // pred_region
      %17 = vsyncadd [#allocation3], 0
      %s18 = sshll.u32 %s0, 4
      %s19 = int_to_ptr.hbm [resolvable:$true] %s18
      %s20 = sshll.u32 [#allocation2], 4
      %s21 = int_to_ptr.vmem [resolvable:$true] %s20
      %26 = dma.hbm_to_vmem [thread:$0]  %s19, 128, %s21, [#allocation3], 64, 64, 4
    $region5: #{tpu_custom_call.1} parent=1 // pred_fallthru
      _
    // Predicated region
    $region6: #{tpu_custom_call.1} parent=1 // pred_check
      _
    $region7: #{tpu_custom_call.1} parent=1 // pred_check_branch
      %28 = sbr.rel (0) target = $region9
    $region8: #{tpu_custom_call.1} parent=1 // pred_region
      %30 = vsyncadd [#allocation6], 0
      %s31 = sshll.u32 %s1, 4
      %s32 = int_to_ptr.hbm [resolvable:$true] %s31
      %s33 = sshll.u32 [#allocation5], 4
      %s34 = int_to_ptr.vmem [resolvable:$true] %s33
      %39 = dma.hbm_to_vmem [thread:$0]  %s32, 1024, %s34, [#allocation6], 64, 64, 4
    $region9: #{tpu_custom_call.1} parent=1 // pred_fallthru
      _
    // Predicated region
    $region10: #{tpu_custom_call.1} parent=1 // pred_check
      _
    $region11: #{tpu_custom_call.1} parent=1 // pred_check_branch
      %41 = sbr.rel (0) target = $region13
    $region12: #{tpu_custom_call.1} parent=1 // pred_region
      %43 = vsyncadd [#allocation6], 0
      %s45 = sshll.u32 %s2, 4
      %s46 = int_to_ptr.hbm [resolvable:$true] %s45
      %s47 = sshll.u32 [#allocation7], 4
      %s48 = int_to_ptr.vmem [resolvable:$true] %s47
      %50 = dma.hbm_to_vmem [thread:$0]  %s46, 64, %s48, [#allocation6]
    $region13: #{tpu_custom_call.1} parent=1 // pred_fallthru
      _
    // Predicated region
    $region14: #{tpu_custom_call.1} parent=1 // pred_check
      _
    $region15: #{tpu_custom_call.1} parent=1 // pred_check_branch
      %52 = sbr.rel (0) target = $region17
    $region16: #{tpu_custom_call.1} parent=1 // pred_region
      %54 = vsyncadd [#allocation9], 0
      %s55 = sshll.u32 %s3, 4
      %s56 = int_to_ptr.hbm [resolvable:$true] %s55
      %s57 = sshll.u32 [#allocation8], 4
      %s58 = int_to_ptr.vmem [resolvable:$true] %s57
      %63 = dma.hbm_to_vmem [thread:$0]  %s56, 1024, %s58, [#allocation9], 64, 64, 4
    $region17: #{tpu_custom_call.1} parent=1 // pred_fallthru
      _
    // Predicated region
    $region18: #{tpu_custom_call.1} parent=1 // pred_check
      _
    $region19: #{tpu_custom_call.1} parent=1 // pred_check_branch
      %65 = sbr.rel (0) target = $region21
    $region20: #{tpu_custom_call.1} parent=1 // pred_region
      %67 = vsyncadd [#allocation9], 0
      %s69 = sshll.u32 %s4, 4
      %s70 = int_to_ptr.hbm [resolvable:$true] %s69
      %s71 = sshll.u32 [#allocation10], 4
      %s72 = int_to_ptr.vmem [resolvable:$true] %s71
      %74 = dma.hbm_to_vmem [thread:$0]  %s70, 128, %s72, [#allocation9]
    $region21: #{tpu_custom_call.1} parent=1 // pred_fallthru
      _
    // Predicated region
    $region22: #{tpu_custom_call.1} parent=1 // pred_check
      _
    $region23: #{tpu_custom_call.1} parent=1 // pred_check_branch
      %76 = sbr.rel (0) target = $region25
    $region24: #{tpu_custom_call.1} parent=1 // pred_region
      %78 = dma.done [#allocation3], 128
    $region25: #{tpu_custom_call.1} parent=1 // pred_fallthru
      _
    // Predicated region
    $region26: #{tpu_custom_call.1} parent=1 // pred_check
      _
    $region27: #{tpu_custom_call.1} parent=1 // pred_check_branch
      %80 = sbr.rel (0) target = $region29
    $region28: #{tpu_custom_call.1} parent=1 // pred_region
      %82 = dma.done [#allocation6], 1024
    $region29: #{tpu_custom_call.1} parent=1 // pred_fallthru
      _
    // Predicated region
    $region30: #{tpu_custom_call.1} parent=1 // pred_check
      _
    $region31: #{tpu_custom_call.1} parent=1 // pred_check_branch
      %84 = sbr.rel (0) target = $region33
    $region32: #{tpu_custom_call.1} parent=1 // pred_region
      %86 = dma.done [#allocation6], 64
    $region33: #{tpu_custom_call.1} parent=1 // pred_fallthru
      _
    // Predicated region
    $region34: #{tpu_custom_call.1} parent=1 // pred_check
      _
    $region35: #{tpu_custom_call.1} parent=1 // pred_check_branch
      %88 = sbr.rel (0) target = $region37
    $region36: #{tpu_custom_call.1} parent=1 // pred_region
      %90 = dma.done [#allocation9], 1024
    $region37: #{tpu_custom_call.1} parent=1 // pred_fallthru
      _
    // Predicated region
    $region38: #{tpu_custom_call.1} parent=1 // pred_check
      _
    $region39: #{tpu_custom_call.1} parent=1 // pred_check_branch
      %92 = sbr.rel (0) target = $region41
    $region40: #{tpu_custom_call.1} parent=1 // pred_region
      %94 = dma.done [#allocation9], 128
    $region41: #{tpu_custom_call.1} parent=1 // pred_fallthru
      _
    %v95 = vld [vmem:[#allocation2] sm:$0xf]
    %v96 = vld [vmem:[#allocation2 + $0x4] sm:$0xf]
    %v97 = vld [vmem:[#allocation5] sm:$0xf]
    %v98 = vld [vmem:[#allocation5 + $0x4] sm:$0xf]
    %v99 = vld [vmem:[#allocation5 + $0x8] sm:$0xf]
    %v100 = vld [vmem:[#allocation5 + $0xc] sm:$0xf]
    %v101 = vld [vmem:[#allocation5 + $0x10] sm:$0xf]
    %v102 = vld [vmem:[#allocation5 + $0x14] sm:$0xf]
    %v103 = vld [vmem:[#allocation5 + $0x18] sm:$0xf]
    %v104 = vld [vmem:[#allocation5 + $0x1c] sm:$0xf]
    %v105 = vld [vmem:[#allocation5 + $0x20] sm:$0xf]
    %v106 = vld [vmem:[#allocation5 + $0x24] sm:$0xf]
    %v107 = vld [vmem:[#allocation5 + $0x28] sm:$0xf]
    %v108 = vld [vmem:[#allocation5 + $0x2c] sm:$0xf]
    %v109 = vld [vmem:[#allocation5 + $0x30] sm:$0xf]
    %v110 = vld [vmem:[#allocation5 + $0x34] sm:$0xf]
    %v111 = vld [vmem:[#allocation5 + $0x38] sm:$0xf]
    %v112 = vld [vmem:[#allocation5 + $0x3c] sm:$0xf]
    %v113 = vld [vmem:[#allocation7] sm:$0x7]
    %v114 = vperm.slane %v113, 0
    %v117 = vunpack.c.l.b16 %v95
    %v118 = vunpack.c.l.b16 %v96
    %v119 = vpack.c.b16 %v118, %v117
    %v137 = vunpack.c.l.b16 %v97
    %v138 = vunpack.c.l.b16 %v98
    %v139 = vunpack.c.l.b16 %v99
    %v140 = vunpack.c.l.b16 %v100
    %v141 = vunpack.c.l.b16 %v101
    %v142 = vunpack.c.l.b16 %v102
    %v143 = vunpack.c.l.b16 %v103
    %v144 = vunpack.c.l.b16 %v104
    %v145 = vunpack.c.l.b16 %v105
    %v146 = vunpack.c.l.b16 %v106
    %v147 = vunpack.c.l.b16 %v107
    %v148 = vunpack.c.l.b16 %v108
    %v149 = vunpack.c.l.b16 %v109
    %v150 = vunpack.c.l.b16 %v110
    %v151 = vunpack.c.l.b16 %v111
    %v152 = vunpack.c.l.b16 %v112
    %v153 = vpack.c.b16 %v138, %v137
    %v154 = vpack.c.b16 %v140, %v139
    %v155 = vpack.c.b16 %v142, %v141
    %v156 = vpack.c.b16 %v144, %v143
    %v157 = vpack.c.b16 %v146, %v145
    %v158 = vpack.c.b16 %v148, %v147
    %v159 = vpack.c.b16 %v150, %v149
    %v160 = vpack.c.b16 %v152, %v151
    %169 = vmatpush.bf16.msra.mxu0 %v160
    %170 = vmatpush.bf16.msra.mxu0 %v159
    %171 = vmatpush.bf16.msra.mxu0 %v158
    %172 = vmatpush.bf16.msra.mxu0 %v157
    %173 = vmatpush.bf16.msra.mxu0 %v156
    %174 = vmatpush.bf16.msra.mxu0 %v155
    %175 = vmatpush.bf16.msra.mxu0 %v154
    %176 = vmatpush.bf16.msra.mxu0 %v153
    %177 = vmatmul.bf16.gmra.mxu0 %v119
    %v178 = vpop.f32.mrf.mxu0
    %v179 = vadd.f32 %v114, %v178
    %v180 = vpop.f32.mrf.mxu0
    %v181 = vadd.f32 %v114, %v180
    %182 = vdwg.mxu0
    %v183 = vmul.f32 %v179, 0.5
    %v184 = vmul.f32 %v181, 0.5
    %v185 = vmul.f32 %v179, 0.70710677
    %v186 = vmul.f32 %v181, 0.70710677
    %v187 = vmul.f32 %v185, %v185
    %v188 = vmin.f32 16.0, %v187
    %v189 = vmul.f32 %v188, 2.1237322e-06
    %v190 = vadd.f32 %v189, 0.00028619796
    %v191 = vmul.f32 %v188, %v190
    %v192 = vadd.f32 %v191, 0.0036580483
    %v193 = vmul.f32 %v188, %v192
    %v194 = vadd.f32 %v193, 0.05243302
    %v195 = vmul.f32 %v188, %v194
    %v196 = vadd.f32 %v195, 0.18741608
    %v197 = vmul.f32 %v188, %v196
    %v198 = vadd.f32 %v197, 1.1283791
    %v199 = vmul.f32 %v185, %v198
    %v200 = vmul.f32 %v188, 3.8918573e-05
    %v201 = vadd.f32 %v200, 0.001143296
    %v202 = vmul.f32 %v188, %v201
    %v203 = vadd.f32 %v202, 0.014752088
    %v204 = vmul.f32 %v188, %v203
    %v205 = vadd.f32 %v204, 0.112945676
    %v206 = vmul.f32 %v188, %v205
    %v207 = vadd.f32 %v206, 0.4994258
    %v208 = vmul.f32 %v188, %v207
    %v209 = vadd.f32 %v208, 1.0
    %v210 = vrcp.pop %v209
    %v211 = vmul.f32 %v209, %v210
    %v212 = vsub.f32 1.0, %v211
    %v213 = vmul.f32 %v210, %v212
    %v214 = vadd.f32 %v210, %v213
    %vm215 = vweird.f32 %v209
    %vm216 = vweird.f32 %v210
    %vm217 = vmor %vm215, %vm216
    %v218 = vsel %vm217, %v210, %v214
    %v219 = vand.u32 2147483647, %v209
    %vm220 = vcmp.eq.f32.partialorder %v219, 8.507059e+37
    %v221 = vand.u32 %v209, 2147483648
    %v222 = vor.u32 1.1754944e-38, %v221
    %v223 = vsel %vm220, %v222, %v218
    %v224 = vmul.f32 %v199, %v223
    %v225 = vmin.f32 %v224, 1.0
    %v226 = vmax.f32 %v225, -1.0
    %v227 = vmul.f32 %v186, %v186
    %v228 = vmin.f32 16.0, %v227
    %v229 = vmul.f32 %v228, 2.1237322e-06
    %v230 = vadd.f32 %v229, 0.00028619796
    %v231 = vmul.f32 %v228, %v230
    %v232 = vadd.f32 %v231, 0.0036580483
    %v233 = vmul.f32 %v228, %v232
    %v234 = vadd.f32 %v233, 0.05243302
    %v235 = vmul.f32 %v228, %v234
    %v236 = vadd.f32 %v235, 0.18741608
    %v237 = vmul.f32 %v228, %v236
    %v238 = vadd.f32 %v237, 1.1283791
    %v239 = vmul.f32 %v186, %v238
    %v240 = vmul.f32 %v228, 3.8918573e-05
    %v241 = vadd.f32 %v240, 0.001143296
    %v242 = vmul.f32 %v228, %v241
    %v243 = vadd.f32 %v242, 0.014752088
    %v244 = vmul.f32 %v228, %v243
    %v245 = vadd.f32 %v244, 0.112945676
    %v246 = vmul.f32 %v228, %v245
    %v247 = vadd.f32 %v246, 0.4994258
    %v248 = vmul.f32 %v228, %v247
    %v249 = vadd.f32 %v248, 1.0
    %v250 = vrcp.pop %v249
    %v251 = vmul.f32 %v249, %v250
    %v252 = vsub.f32 1.0, %v251
    %v253 = vmul.f32 %v250, %v252
    %v254 = vadd.f32 %v250, %v253
    %vm255 = vweird.f32 %v249
    %vm256 = vweird.f32 %v250
    %vm257 = vmor %vm255, %vm256
    %v258 = vsel %vm257, %v250, %v254
    %v259 = vand.u32 2147483647, %v249
    %vm260 = vcmp.eq.f32.partialorder %v259, 8.507059e+37
    %v261 = vand.u32 %v249, 2147483648
    %v262 = vor.u32 1.1754944e-38, %v261
    %v263 = vsel %vm260, %v262, %v258
    %v264 = vmul.f32 %v239, %v263
    %v265 = vmin.f32 %v264, 1.0
    %v266 = vmax.f32 %v265, -1.0
    %v267 = vadd.f32 %v226, 1.0
    %v268 = vadd.f32 %v266, 1.0
    %v269 = vmul.f32 %v183, %v267
    %v270 = vmul.f32 %v184, %v268
    %v271 = vpack.c.bf16 %v270, %v269
    %v272 = vld [vmem:[#allocation8] sm:$0xf]
    %v273 = vld [vmem:[#allocation8 + $0x4] sm:$0xf]
    %v274 = vld [vmem:[#allocation8 + $0x8] sm:$0xf]
    %v275 = vld [vmem:[#allocation8 + $0xc] sm:$0xf]
    %v276 = vld [vmem:[#allocation8 + $0x10] sm:$0xf]
    %v277 = vld [vmem:[#allocation8 + $0x14] sm:$0xf]
    %v278 = vld [vmem:[#allocation8 + $0x18] sm:$0xf]
    %v279 = vld [vmem:[#allocation8 + $0x1c] sm:$0xf]
    %v280 = vld [vmem:[#allocation8 + $0x20] sm:$0xf]
    %v281 = vld [vmem:[#allocation8 + $0x24] sm:$0xf]
    %v282 = vld [vmem:[#allocation8 + $0x28] sm:$0xf]
    %v283 = vld [vmem:[#allocation8 + $0x2c] sm:$0xf]
    %v284 = vld [vmem:[#allocation8 + $0x30] sm:$0xf]
    %v285 = vld [vmem:[#allocation8 + $0x34] sm:$0xf]
    %v286 = vld [vmem:[#allocation8 + $0x38] sm:$0xf]
    %v287 = vld [vmem:[#allocation8 + $0x3c] sm:$0xf]
    %v288 = vld [vmem:[#allocation10] sm:$0x1f]
    %v289 = vperm.slane %v288, 0
    %v306 = vunpack.c.l.b16 %v272
    %v307 = vunpack.c.l.b16 %v273
    %v308 = vunpack.c.l.b16 %v274
    %v309 = vunpack.c.l.b16 %v275
    %v310 = vunpack.c.l.b16 %v276
    %v311 = vunpack.c.l.b16 %v277
    %v312 = vunpack.c.l.b16 %v278
    %v313 = vunpack.c.l.b16 %v279
    %v314 = vunpack.c.l.b16 %v280
    %v315 = vunpack.c.l.b16 %v281
    %v316 = vunpack.c.l.b16 %v282
    %v317 = vunpack.c.l.b16 %v283
    %v318 = vunpack.c.l.b16 %v284
    %v319 = vunpack.c.l.b16 %v285
    %v320 = vunpack.c.l.b16 %v286
    %v321 = vunpack.c.l.b16 %v287
    %v322 = vpack.c.b16 %v307, %v306
    %v323 = vpack.c.b16 %v309, %v308
    %v324 = vpack.c.b16 %v311, %v310
    %v325 = vpack.c.b16 %v313, %v312
    %v326 = vpack.c.b16 %v315, %v314
    %v327 = vpack.c.b16 %v317, %v316
    %v328 = vpack.c.b16 %v319, %v318
    %v329 = vpack.c.b16 %v321, %v320
    %338 = vmatpush.bf16.msra.mxu0 %v329
    %339 = vmatpush.bf16.msra.mxu0 %v328
    %340 = vmatpush.bf16.msra.mxu0 %v327
    %341 = vmatpush.bf16.msra.mxu0 %v326
    %342 = vmatpush.bf16.msra.mxu0 %v325
    %343 = vmatpush.bf16.msra.mxu0 %v324
    %344 = vmatpush.bf16.msra.mxu0 %v323
    %345 = vmatpush.bf16.msra.mxu0 %v322
    %346 = vmatmul.bf16.gmra.mxu0 %v271
    %v347 = vpop.f32.mrf.mxu0
    %v348 = vadd.f32 %v289, %v347
    %v349 = vpop.f32.mrf.mxu0
    %v350 = vadd.f32 %v289, %v349
    %351 = vdwg.mxu0
    %352 = vst [vmem:[#allocation11] sm:$0xff] %v348
    %353 = vst [vmem:[#allocation11 + $0x8] sm:$0xff] %v350
    // Predicated region
    $region42: #{tpu_custom_call.1} parent=1 // pred_check
      _
    $region43: #{tpu_custom_call.1} parent=1 // pred_check_branch
      %355 = sbr.rel (0) target = $region45
    $region44: #{tpu_custom_call.1} parent=1 // pred_region
      %357 = vsyncadd [#allocation4], 0
      %s358 = sshll.u32 [#allocation11], 4
      %s359 = int_to_ptr.vmem [resolvable:$true] %s358
      %s360 = sshll.u32 %s5, 4
      %s361 = int_to_ptr.hbm [resolvable:$true] %s360
      %366 = dma.vmem_to_hbm [thread:$0]  %s359, 256, %s361, [#allocation4], 128, 128, 8
    $region45: #{tpu_custom_call.1} parent=1 // pred_fallthru
      _
    // Predicated region
    $region46: #{tpu_custom_call.1} parent=1 // pred_check
      _
    $region47: #{tpu_custom_call.1} parent=1 // pred_check_branch
      %368 = sbr.rel (0) target = $region49
    $region48: #{tpu_custom_call.1} parent=1 // pred_region
      %370 = dma.done [#allocation4], 256
    $region49: #{tpu_custom_call.1} parent=1 // pred_fallthru
      _
    %371 = vsyncpa [#allocation3], 1
    %372 = vsyncpa [#allocation6], 1
    %373 = vsyncpa [#allocation9], 1
    %374 = vsyncpa [#allocation4], 1

</llo_original>
